<compile_context>
chip_gen: v7x
topology: tpu7x:2x2x1
jax: 0.10.0
libtpu: 0.0.40
codegen_flags: <defaults>
</compile_context>

<pallas_src>
import functools

import jax
import jax.numpy as jnp
import numpy as np
from jax.experimental import pallas as pl
from jax.experimental.pallas import tpu as pltpu


# ----------------------------------------------------------------------------
# Pallas kernel (one grid step == one frame of the chunk)
# ----------------------------------------------------------------------------
def _online_layer_kernel(
    idx_ref,     # SMEM (2,) int32: [fifo_idx0, acc_idx0] for frame 0 of the chunk
    x_ref,       # VMEM (1, C_in, V)              current frame (auto-pipelined)
    a_ref,       # VMEM (P, V, V)                 graph * edge_importance
    ab_ref,      # VMEM (C_out, V)                conv bias folded through aggregation
    w_ref,       # VMEM (P*C_out[+C_out], C_in)   fused conv (+ residual conv) weights
    gm_ref,      # VMEM (C_out, V)                main LayerNorm gamma
    bm_ref,      # VMEM (C_out, V)                main LayerNorm beta
    gr_ref,      # VMEM (C_out, V)                residual LayerNorm gamma
    br_ref,      # VMEM (C_out, V)                residual LayerNorm beta
    state_ref,   # VMEM (fifo_size+stride, C_out, V)  packed [FIFO ; accumulator] in
    out_ref,     # VMEM (1, C_out, V)             per-frame output block
    nstate_ref,  # VMEM (fifo_size+stride, C_out, V)  packed state out (aliased)
    *,
    out_channels,
    num_partitions,
    num_joints,
    fifo_size,
    stride,
    eps,
    is_residual,
    is_residual_conv,
):
    C, P, V = out_channels, num_partitions, num_joints
    t = pl.program_id(0)

    # Bring the packed state into the resident output block once; every frame
    # of the chunk then updates it purely in VMEM (no per-frame HBM traffic).
    @pl.when(t == 0)
    def _():
        nstate_ref[...] = state_ref[...]

    x = x_ref[0]                                             # (C_in, V)

    # ---- fused 1x1 conv (+ residual conv rows): one MXU push, K = C_in -----
    conv = jnp.dot(w_ref[...], x, preferred_element_type=jnp.float32)

    # ---- spatial aggregation: P tiny matmuls, conv bias folded through A ---
    agg = ab_ref[...]
    for p in range(P):                                       # P <= 3, static unroll
        agg = agg + jnp.dot(conv[p * C:(p + 1) * C, :], a_ref[p],
                            preferred_element_type=jnp.float32)

    # ---- FIFO / accumulator slot update (state resident across the grid) ---
    fi = (idx_ref[0] + t) % fifo_size
    ai = fifo_size + (idx_ref[1] + t) % stride
    slot = nstate_ref[ai] + agg - nstate_ref[fi]
    nstate_ref[ai] = slot
    nstate_ref[fi] = agg

    # ---- bn_relu: LayerNorm([C_out, 1, V]) + ReLU (fused one-pass stats) ---
    # TODO(synk): the custom `LayerNorm` class is not in the provided source;
    # nn.LayerNorm([C_out, 1, V]) semantics (whole-slab mean/var with
    # per-element affine) are assumed.
    inv_n = 1.0 / (C * V)
    mu = jnp.sum(slot) * inv_n
    var = jnp.sum(slot * slot) * inv_n - mu * mu
    y = (slot - mu) * jax.lax.rsqrt(var + eps)
    y = jnp.maximum(y * gm_ref[...] + bm_ref[...], 0.0)

    # ---- residual branch + final ReLU (self.do) ------------------------------
    if not is_residual:
        out = y                                              # res = 0, do = Dropout
    elif is_residual_conv:
        r = conv[P * C:(P + 1) * C, :]                       # own rows, no col slice
        mu_r = jnp.sum(r) * inv_n
        var_r = jnp.sum(r * r) * inv_n - mu_r * mu_r
        res = (r - mu_r) * jax.lax.rsqrt(var_r + eps) * gr_ref[...] + br_ref[...]
        out = jnp.maximum(y + res, 0.0)
    else:
        out = jnp.maximum(y + x, 0.0)                        # identity residual

    out_ref[0] = out


# ----------------------------------------------------------------------------
# One-time layer setup (hoists every per-frame-invariant computation)
# ----------------------------------------------------------------------------
def make_online_layer(graph, edge_importance, params, *, in_channels, out_channels,
                      kernel_size, stride, num_partitions, num_joints,
                      is_residual, chunk, eps=1e-5):
    C_in, C_out, P, V, T = in_channels, out_channels, num_partitions, num_joints, chunk
    fifo_size = stride * (kernel_size - 1) + 1
    state_rows = fifo_size + stride
    is_residual_conv = is_residual and not (C_in == C_out and stride == 1)
    if is_residual and not is_residual_conv:
        assert C_in == C_out, "identity residual requires C_in == C_out"

    # --- prepare (runs once, not in the per-frame hot path) ------------------
    a_eff = (jnp.asarray(graph, jnp.float32) *
             jnp.asarray(edge_importance, jnp.float32))           # eval_()  (P, V, V)

    w_conv = jnp.asarray(params["w_conv"], jnp.float32).reshape(P * C_out, C_in)
    b_conv = jnp.asarray(params["b_conv"], jnp.float32).reshape(P, C_out)
    if is_residual_conv:
        w_res = jnp.asarray(params["w_res"], jnp.float32).reshape(C_out, C_in)
        w_all = jnp.concatenate([w_conv, w_res], axis=0)           # (P*C_out+C_out, C_in)
    else:
        w_all = w_conv                                             # (P*C_out, C_in)

    # fold the conv bias through the aggregation: sum_p b[p,c] * sum_u A[p,u,v]
    agg_bias = jnp.einsum("pc,pv->cv", b_conv, a_eff.sum(axis=1))  # (C_out, V)

    g_main = jnp.asarray(params["g_main"], jnp.float32).reshape(C_out, V)
    b_main = jnp.asarray(params["b_main"], jnp.float32).reshape(C_out, V)
    if is_residual_conv:
        g_res = jnp.asarray(params["g_res"], jnp.float32).reshape(C_out, V)
        b_res = jnp.asarray(params["b_res"], jnp.float32).reshape(C_out, V)
    else:
        g_res = jnp.ones((C_out, V), jnp.float32)
        b_res = jnp.zeros((C_out, V), jnp.float32)

    kernel = functools.partial(
        _online_layer_kernel,
        out_channels=C_out, num_partitions=P, num_joints=V,
        fifo_size=fifo_size, stride=stride, eps=eps,
        is_residual=is_residual, is_residual_conv=is_residual_conv)

    rows = w_all.shape[0]
    flops = T * (2 * rows * C_in * V + 2 * P * C_out * V * V + 16 * C_out * V)
    bytes_accessed = 4 * (T * (C_in + C_out) * V            # frames in, outputs
                          + 2 * state_rows * C_out * V      # packed state in/out
                          + P * V * V + rows * C_in + 5 * C_out * V) + 8

    vmem = pl.BlockSpec(memory_space=pltpu.MemorySpace.VMEM)
    smem = pl.BlockSpec(memory_space=pltpu.MemorySpace.SMEM)

    call = pl.pallas_call(
        kernel,
        grid=(T,),
        out_shape=(
            jax.ShapeDtypeStruct((T, C_out, V), jnp.float32),
            jax.ShapeDtypeStruct((state_rows, C_out, V), jnp.float32),
        ),
        in_specs=[
            smem,                                              # idx (runtime scalars)
            pl.BlockSpec((1, C_in, V), lambda t: (t, 0, 0)),   # frames (pipelined)
            vmem,                                              # a_eff
            vmem,                                              # agg_bias
            vmem,                                              # w_all
            vmem, vmem,                                        # g_main, b_main
            vmem, vmem,                                        # g_res, b_res
            vmem,                                              # packed state in
        ],
        out_specs=(
            pl.BlockSpec((1, C_out, V), lambda t: (t, 0, 0)),  # per-frame output
            vmem,                                              # packed state out
        ),
        input_output_aliases={9: 1},                           # state -> new_state
        compiler_params=pltpu.CompilerParams(
            dimension_semantics=("arbitrary",)),               # sequential state carry
        cost_estimate=pl.CostEstimate(flops=flops, transcendentals=2 * T,
                                      bytes_accessed=bytes_accessed),
    )

    @jax.jit
    def forward(frames, state, fifo_idx, acc_idx):
        """frames: (T, 1, C_in, 1, V) chunk.  state: packed (fifo_size+stride, C_out, V).

        Returns (out (T,1,C_out,1,V), new_state, next_fifo_idx, next_acc_idx)."""
        x = frames.reshape(T, C_in, V).astype(jnp.float32)
        idx = jnp.stack([fifo_idx, acc_idx]).astype(jnp.int32)
        out, new_state = call(idx, x, a_eff, agg_bias, w_all,
                              g_main, b_main, g_res, b_res, state)
        return (out.reshape(T, 1, C_out, 1, V), new_state,
                (fifo_idx + T) % fifo_size, (acc_idx + T) % stride)

    return forward


# ----------------------------------------------------------------------------
# Pure-numpy per-frame reference (mirrors the PyTorch forward)
# ----------------------------------------------------------------------------
def reference_step(x, a_eff, p, state, fi, ai, *, C_out, P, V, residual,
                   is_res_conv, fifo_size, stride, eps=1e-5):
    x2d = x[0, :, 0, :]
    Wc = p["w_conv"].reshape(C_out * P, -1)
    conv = Wc @ x2d + p["b_conv"].reshape(-1)[:, None]             # (C_out*P, V)
    agg = np.einsum("pcu,puv->cv", conv.reshape(P, C_out, V), a_eff)

    fifo = state["fifo"].copy()
    acc = state["acc"].copy()
    slot = acc[ai] + agg - fifo[fi]
    acc[ai] = slot
    fifo[fi] = agg

    mu, var = slot.mean(), slot.var()
    y = (slot - mu) / np.sqrt(var + eps)
    y = y * p["g_main"].reshape(C_out, V) + p["b_main"].reshape(C_out, V)
    y = np.maximum(y, 0.0)

    if not residual:
        res = 0.0
    elif is_res_conv:
        r = p["w_res"].reshape(C_out, -1) @ x2d
        mu_r, var_r = r.mean(), r.var()
        res = (r - mu_r) / np.sqrt(var_r + eps) * p["g_res"].reshape(C_out, V) \
            + p["b_res"].reshape(C_out, V)
    else:
        res = x2d

    out = y + res
    if residual:
        out = np.maximum(out, 0.0)
    return (out.reshape(1, C_out, 1, V), {"fifo": fifo, "acc": acc},
            (fi + 1) % fifo_size, (ai + 1) % stride)


# ----------------------------------------------------------------------------
def run_config(key, *, C_in, C_out, P, V, kernel_size, stride, residual,
               chunk, n_chunks):
    fifo_size = stride * (kernel_size - 1) + 1
    is_res_conv = residual and not (C_in == C_out and stride == 1)
    ks = jax.random.split(key, 16)

    graph = jax.random.uniform(ks[0], (P, V, V), jnp.float32)
    edge_importance = 1.0 + 0.1 * jax.random.normal(ks[1], (P, V, V), jnp.float32)
    params = {
        "w_conv": 0.2 * jax.random.normal(ks[2], (C_out * P, C_in, 1, 1), jnp.float32),
        "b_conv": 0.1 * jax.random.normal(ks[3], (C_out * P,), jnp.float32),
        "w_res":  0.2 * jax.random.normal(ks[4], (C_out, C_in, 1, 1), jnp.float32),
        "g_main": 1.0 + 0.1 * jax.random.normal(ks[5], (C_out, 1, V), jnp.float32),
        "b_main": 0.1 * jax.random.normal(ks[6], (C_out, 1, V), jnp.float32),
        "g_res":  1.0 + 0.1 * jax.random.normal(ks[7], (C_out, 1, V), jnp.float32),
        "b_res":  0.1 * jax.random.normal(ks[8], (C_out, 1, V), jnp.float32),
    }

    forward = make_online_layer(
        graph, edge_importance, params,
        in_channels=C_in, out_channels=C_out, kernel_size=kernel_size,
        stride=stride, num_partitions=P, num_joints=V, is_residual=residual,
        chunk=chunk)

    # state (module inits zeros; use non-trivial values to exercise add/sub path)
    fifo = 0.05 * jax.random.normal(ks[9], (fifo_size, C_out, V), jnp.float32)
    acc = 0.05 * jax.random.normal(ks[10], (stride, C_out, V), jnp.float32)
    state = jnp.concatenate([fifo, acc], axis=0)               # packed [FIFO ; acc]
    fi, ai = jnp.int32(0), jnp.int32(0)

    # numpy mirrors (taken before the streaming loop)
    np_state = {"fifo": np.array(fifo, np.float64), "acc": np.array(acc, np.float64)}
    np_fi, np_ai = 0, 0
    a_eff_np = np.array(graph, np.float64) * np.array(edge_importance, np.float64)
    pnp = {k: np.array(v, np.float64) for k, v in params.items()}

    frames = 0.5 * jax.random.normal(ks[11], (n_chunks, chunk, 1, C_in, 1, V),
                                     jnp.float32)
    for c in range(n_chunks):
        out, state, fi, ai = forward(frames[c], state, fi, ai)
        jax.block_until_ready((out, state))
        out_np = np.asarray(out)
        for t in range(chunk):
            ref_out, np_state, np_fi, np_ai = reference_step(
                np.array(frames[c, t], np.float64), a_eff_np, pnp, np_state,
                np_fi, np_ai, C_out=C_out, P=P, V=V, residual=residual,
                is_res_conv=is_res_conv, fifo_size=fifo_size, stride=stride)
            np.testing.assert_allclose(out_np[t], ref_out, rtol=2e-3, atol=2e-3)

    state_np = np.asarray(state)
    np.testing.assert_allclose(state_np[:fifo_size], np_state["fifo"],
                               rtol=2e-3, atol=2e-3)
    np.testing.assert_allclose(state_np[fifo_size:], np_state["acc"],
                               rtol=2e-3, atol=2e-3)


if __name__ == "__main__":
    key = jax.random.PRNGKey(0)
    kA, kB, kC = jax.random.split(key, 3)
    # A: residual 1x1-conv branch (C_in != C_out), 2 chunks of 3 frames (idx wrap)
    run_config(kA, C_in=4, C_out=8, P=3, V=16, kernel_size=3, stride=1,
               residual=True, chunk=3, n_chunks=2)
    # B: identity residual (C_in == C_out, stride == 1), 2 chunks of 2 frames
    run_config(kB, C_in=8, C_out=8, P=3, V=16, kernel_size=3, stride=1,
               residual=True, chunk=2, n_chunks=2)
    # C: no residual, 1 chunk of 2 frames
    run_config(kC, C_in=4, C_out=8, P=2, V=16, kernel_size=3, stride=1,
               residual=False, chunk=2, n_chunks=1)
    print("KERNEL_OK")
</pallas_src>

<mosaic_0001>
module attributes {stable_mosaic.version = 11 : i64} {
  func.func @_online_layer_kernel(%arg0: i32, %arg1: memref<2xi32, #tpu.memory_space<smem>>, %arg2: memref<1x4x16xf32, #tpu.memory_space<vmem>>, %arg3: memref<3x16x16xf32, #tpu.memory_space<vmem>>, %arg4: memref<8x16xf32, #tpu.memory_space<vmem>>, %arg5: memref<32x4xf32, #tpu.memory_space<vmem>>, %arg6: memref<8x16xf32, #tpu.memory_space<vmem>>, %arg7: memref<8x16xf32, #tpu.memory_space<vmem>>, %arg8: memref<8x16xf32, #tpu.memory_space<vmem>>, %arg9: memref<8x16xf32, #tpu.memory_space<vmem>>, %arg10: memref<4x8x16xf32, #tpu.memory_space<vmem>>, %arg11: memref<1x8x16xf32, #tpu.memory_space<vmem>>, %arg12: memref<4x8x16xf32, #tpu.memory_space<vmem>>) attributes {dimension_semantics = [#tpu.dimension_semantics<arbitrary>], iteration_bounds = array<i64: 3>, scalar_prefetch = 0 : i64, scratch_operands = 0 : i64, tpu.core_type = #tpu.core_type<tc>, window_params = [{transform_indices = @transform_0, window_bounds = array<i64: 2>}, {transform_indices = @transform_1, window_bounds = array<i64: 1, 4, 16>}, {pipeline_mode = #tpu.pipeline_mode<synchronous>, transform_indices = @transform_2, window_bounds = array<i64: 3, 16, 16>}, {pipeline_mode = #tpu.pipeline_mode<synchronous>, transform_indices = @transform_3, window_bounds = array<i64: 8, 16>}, {pipeline_mode = #tpu.pipeline_mode<synchronous>, transform_indices = @transform_4, window_bounds = array<i64: 32, 4>}, {pipeline_mode = #tpu.pipeline_mode<synchronous>, transform_indices = @transform_5, window_bounds = array<i64: 8, 16>}, {pipeline_mode = #tpu.pipeline_mode<synchronous>, transform_indices = @transform_6, window_bounds = array<i64: 8, 16>}, {pipeline_mode = #tpu.pipeline_mode<synchronous>, transform_indices = @transform_7, window_bounds = array<i64: 8, 16>}, {pipeline_mode = #tpu.pipeline_mode<synchronous>, transform_indices = @transform_8, window_bounds = array<i64: 8, 16>}, {pipeline_mode = #tpu.pipeline_mode<synchronous>, transform_indices = @transform_9, window_bounds = array<i64: 4, 8, 16>}, {transform_indices = @transform_10, window_bounds = array<i64: 1, 8, 16>}, {pipeline_mode = #tpu.pipeline_mode<synchronous>, transform_indices = @transform_11, window_bounds = array<i64: 4, 8, 16>}]} {
    %c0_i32 = arith.constant 0 : i32
    %0 = arith.cmpi eq, %arg0, %c0_i32 : i32
    %1 = arith.extui %0 : i1 to i32
    %c0_i32_0 = arith.constant 0 : i32
    %2 = arith.cmpi ne, %1, %c0_i32_0 : i32
    scf.if %2 {
      %c0_61 = arith.constant 0 : index
      %c0_62 = arith.constant 0 : index
      %c0_63 = arith.constant 0 : index
      %119 = vector.load %arg10[%c0_61, %c0_62, %c0_63] : memref<4x8x16xf32, #tpu.memory_space<vmem>>, vector<4x8x16xf32>
      %c0_64 = arith.constant 0 : index
      %c0_65 = arith.constant 0 : index
      %c0_66 = arith.constant 0 : index
      %120 = vector.load %arg12[%c0_64, %c0_65, %c0_66] : memref<4x8x16xf32, #tpu.memory_space<vmem>>, vector<4x8x16xf32>
      tpu.vector_store %arg12[%c0_64, %c0_65, %c0_66], %119 {strides = array<i32>} : memref<4x8x16xf32, #tpu.memory_space<vmem>>, vector<4x8x16xf32>,
    } else {
    }
    %c0 = arith.constant 0 : index
    %c0_1 = arith.constant 0 : index
    %c0_2 = arith.constant 0 : index
    %3 = vector.load %arg2[%c0, %c0_1, %c0_2] : memref<1x4x16xf32, #tpu.memory_space<vmem>>, vector<1x4x16xf32>
    %4 = vector.shape_cast %3 : vector<1x4x16xf32> to vector<4x16xf32>
    %c0_3 = arith.constant 0 : index
    %c0_4 = arith.constant 0 : index
    %5 = vector.load %arg5[%c0_3, %c0_4] : memref<32x4xf32, #tpu.memory_space<vmem>>, vector<32x4xf32>
    %cst = arith.constant dense<0.000000e+00> : vector<32x16xf32>
    %6 = tpu.matmul %5, %4, %cst {dimension_numbers = #tpu.dot_dimension_numbers<[1], [0], [0], [1], [0, 0, 1, 1], [], []>} : vector<32x4xf32>, vector<4x16xf32>, vector<32x16xf32> -> vector<32x16xf32>
    %c0_5 = arith.constant 0 : index
    %c0_6 = arith.constant 0 : index
    %7 = vector.load %arg4[%c0_5, %c0_6] : memref<8x16xf32, #tpu.memory_space<vmem>>, vector<8x16xf32>
    %8 = vector.extract_strided_slice %6 {offsets = [0, 0], sizes = [8, 16], strides = [1, 1]} : vector<32x16xf32> to vector<8x16xf32>
    %c0_7 = arith.constant 0 : index
    %c0_8 = arith.constant 0 : index
    %c0_9 = arith.constant 0 : index
    %9 = vector.load %arg3[%c0_7, %c0_8, %c0_9] : memref<3x16x16xf32, #tpu.memory_space<vmem>>, vector<1x16x16xf32>
    %10 = vector.shape_cast %9 : vector<1x16x16xf32> to vector<16x16xf32>
    %cst_10 = arith.constant dense<0.000000e+00> : vector<8x16xf32>
    %11 = tpu.matmul %8, %10, %cst_10 {dimension_numbers = #tpu.dot_dimension_numbers<[1], [0], [0], [1], [0, 0, 1, 1], [], []>} : vector<8x16xf32>, vector<16x16xf32>, vector<8x16xf32> -> vector<8x16xf32>
    %12 = arith.addf %7, %11 : vector<8x16xf32>
    %13 = vector.extract_strided_slice %6 {offsets = [8, 0], sizes = [8, 16], strides = [1, 1]} : vector<32x16xf32> to vector<8x16xf32>
    %c1 = arith.constant 1 : index
    %c0_11 = arith.constant 0 : index
    %c0_12 = arith.constant 0 : index
    %14 = vector.load %arg3[%c1, %c0_11, %c0_12] : memref<3x16x16xf32, #tpu.memory_space<vmem>>, vector<1x16x16xf32>
    %15 = vector.shape_cast %14 : vector<1x16x16xf32> to vector<16x16xf32>
    %cst_13 = arith.constant dense<0.000000e+00> : vector<8x16xf32>
    %16 = tpu.matmul %13, %15, %cst_13 {dimension_numbers = #tpu.dot_dimension_numbers<[1], [0], [0], [1], [0, 0, 1, 1], [], []>} : vector<8x16xf32>, vector<16x16xf32>, vector<8x16xf32> -> vector<8x16xf32>
    %17 = arith.addf %12, %16 : vector<8x16xf32>
    %18 = vector.extract_strided_slice %6 {offsets = [16, 0], sizes = [8, 16], strides = [1, 1]} : vector<32x16xf32> to vector<8x16xf32>
    %c2 = arith.constant 2 : index
    %c0_14 = arith.constant 0 : index
    %c0_15 = arith.constant 0 : index
    %19 = vector.load %arg3[%c2, %c0_14, %c0_15] : memref<3x16x16xf32, #tpu.memory_space<vmem>>, vector<1x16x16xf32>
    %20 = vector.shape_cast %19 : vector<1x16x16xf32> to vector<16x16xf32>
    %cst_16 = arith.constant dense<0.000000e+00> : vector<8x16xf32>
    %21 = tpu.matmul %18, %20, %cst_16 {dimension_numbers = #tpu.dot_dimension_numbers<[1], [0], [0], [1], [0, 0, 1, 1], [], []>} : vector<8x16xf32>, vector<16x16xf32>, vector<8x16xf32> -> vector<8x16xf32>
    %22 = arith.addf %17, %21 : vector<8x16xf32>
    %c0_17 = arith.constant 0 : index
    %23 = memref.load %arg1[%c0_17] : memref<2xi32, #tpu.memory_space<smem>>
    %24 = arith.addi %23, %arg0 : i32
    %c3_i32 = arith.constant 3 : i32
    %c0_i32_18 = arith.constant 0 : i32
    %25 = arith.cmpi eq, %c3_i32, %c0_i32_18 : i32
    %c1_i32 = arith.constant 1 : i32
    %26 = arith.select %25, %c1_i32, %c3_i32 : i32
    %27 = arith.remsi %24, %26 : i32
    %c0_i32_19 = arith.constant 0 : i32
    %28 = arith.cmpi ne, %27, %c0_i32_19 : i32
    %c0_i32_20 = arith.constant 0 : i32
    %29 = arith.cmpi slt, %27, %c0_i32_20 : i32
    %c0_i32_21 = arith.constant 0 : i32
    %30 = arith.cmpi slt, %26, %c0_i32_21 : i32
    %31 = arith.xori %29, %30 : i1
    %32 = arith.andi %31, %28 : i1
    %33 = arith.addi %27, %26 : i32
    %34 = arith.select %32, %33, %27 : i32
    %c1_22 = arith.constant 1 : index
    %35 = memref.load %arg1[%c1_22] : memref<2xi32, #tpu.memory_space<smem>>
    %36 = arith.addi %35, %arg0 : i32
    %c1_i32_23 = arith.constant 1 : i32
    %c0_i32_24 = arith.constant 0 : i32
    %37 = arith.cmpi eq, %c1_i32_23, %c0_i32_24 : i32
    %c1_i32_25 = arith.constant 1 : i32
    %38 = arith.select %37, %c1_i32_25, %c1_i32_23 : i32
    %39 = arith.remsi %36, %38 : i32
    %c0_i32_26 = arith.constant 0 : i32
    %40 = arith.cmpi ne, %39, %c0_i32_26 : i32
    %c0_i32_27 = arith.constant 0 : i32
    %41 = arith.cmpi slt, %39, %c0_i32_27 : i32
    %c0_i32_28 = arith.constant 0 : i32
    %42 = arith.cmpi slt, %38, %c0_i32_28 : i32
    %43 = arith.xori %41, %42 : i1
    %44 = arith.andi %43, %40 : i1
    %45 = arith.addi %39, %38 : i32
    %46 = arith.select %44, %45, %39 : i32
    %c3_i32_29 = arith.constant 3 : i32
    %47 = arith.addi %c3_i32_29, %46 : i32
    %48 = arith.index_cast %47 : i32 to index
    %c0_30 = arith.constant 0 : index
    %c0_31 = arith.constant 0 : index
    %49 = vector.load %arg12[%48, %c0_30, %c0_31] : memref<4x8x16xf32, #tpu.memory_space<vmem>>, vector<1x8x16xf32>
    %50 = vector.shape_cast %49 : vector<1x8x16xf32> to vector<8x16xf32>
    %51 = arith.addf %50, %22 : vector<8x16xf32>
    %52 = arith.index_cast %34 : i32 to index
    %c0_32 = arith.constant 0 : index
    %c0_33 = arith.constant 0 : index
    %53 = vector.load %arg12[%52, %c0_32, %c0_33] : memref<4x8x16xf32, #tpu.memory_space<vmem>>, vector<1x8x16xf32>
    %54 = vector.shape_cast %53 : vector<1x8x16xf32> to vector<8x16xf32>
    %55 = arith.subf %51, %54 : vector<8x16xf32>
    %56 = arith.index_cast %47 : i32 to index
    %c0_34 = arith.constant 0 : index
    %c0_35 = arith.constant 0 : index
    %57 = vector.load %arg12[%56, %c0_34, %c0_35] : memref<4x8x16xf32, #tpu.memory_space<vmem>>, vector<1x8x16xf32>
    %58 = vector.shape_cast %57 : vector<1x8x16xf32> to vector<8x16xf32>
    %59 = vector.shape_cast %55 : vector<8x16xf32> to vector<1x8x16xf32>
    tpu.vector_store %arg12[%56, %c0_34, %c0_35], %59 {strides = array<i32>} : memref<4x8x16xf32, #tpu.memory_space<vmem>>, vector<1x8x16xf32>,
    %60 = arith.index_cast %34 : i32 to index
    %c0_36 = arith.constant 0 : index
    %c0_37 = arith.constant 0 : index
    %61 = vector.load %arg12[%60, %c0_36, %c0_37] : memref<4x8x16xf32, #tpu.memory_space<vmem>>, vector<1x8x16xf32>
    %62 = vector.shape_cast %61 : vector<1x8x16xf32> to vector<8x16xf32>
    %63 = vector.shape_cast %22 : vector<8x16xf32> to vector<1x8x16xf32>
    tpu.vector_store %arg12[%60, %c0_36, %c0_37], %63 {strides = array<i32>} : memref<4x8x16xf32, #tpu.memory_space<vmem>>, vector<1x8x16xf32>,
    %64 = vector.shape_cast %55 : vector<8x16xf32> to vector<1x8x16xf32>
    %cst_38 = arith.constant dense<0.000000e+00> : vector<1xf32>
    %65 = vector.multi_reduction <add>, %64, %cst_38 [1, 2] : vector<1x8x16xf32> to vector<1xf32>
    %66 = vector.shape_cast %65 : vector<1xf32> to vector<1x1x1xf32>
    %67 = vector.extract %66[0, 0, 0] : f32 from vector<1x1x1xf32>
    %cst_39 = arith.constant 7.812500e-03 : f32
    %68 = arith.mulf %67, %cst_39 : f32
    %69 = arith.mulf %55, %55 : vector<8x16xf32>
    %70 = vector.shape_cast %69 : vector<8x16xf32> to vector<1x8x16xf32>
    %cst_40 = arith.constant dense<0.000000e+00> : vector<1xf32>
    %71 = vector.multi_reduction <add>, %70, %cst_40 [1, 2] : vector<1x8x16xf32> to vector<1xf32>
    %72 = vector.shape_cast %71 : vector<1xf32> to vector<1x1x1xf32>
    %73 = vector.extract %72[0, 0, 0] : f32 from vector<1x1x1xf32>
    %cst_41 = arith.constant 7.812500e-03 : f32
    %74 = arith.mulf %73, %cst_41 : f32
    %75 = arith.mulf %68, %68 : f32
    %76 = arith.subf %74, %75 : f32
    %77 = vector.broadcast %68 : f32 to vector<8x16xf32>
    %78 = arith.subf %55, %77 : vector<8x16xf32>
    %cst_42 = arith.constant 9.99999974E-6 : f32
    %79 = arith.addf %76, %cst_42 : f32
    %80 = math.rsqrt %79 : f32
    %81 = vector.broadcast %80 : f32 to vector<8x16xf32>
    %82 = arith.mulf %78, %81 : vector<8x16xf32>
    %c0_43 = arith.constant 0 : index
    %c0_44 = arith.constant 0 : index
    %83 = vector.load %arg6[%c0_43, %c0_44] : memref<8x16xf32, #tpu.memory_space<vmem>>, vector<8x16xf32>
    %84 = arith.mulf %82, %83 : vector<8x16xf32>
    %c0_45 = arith.constant 0 : index
    %c0_46 = arith.constant 0 : index
    %85 = vector.load %arg7[%c0_45, %c0_46] : memref<8x16xf32, #tpu.memory_space<vmem>>, vector<8x16xf32>
    %86 = arith.addf %84, %85 : vector<8x16xf32>
    %cst_47 = arith.constant 0.000000e+00 : f32
    %87 = vector.broadcast %cst_47 : f32 to vector<8x16xf32>
    %88 = arith.maximumf %86, %87 : vector<8x16xf32>
    %89 = vector.extract_strided_slice %6 {offsets = [24, 0], sizes = [8, 16], strides = [1, 1]} : vector<32x16xf32> to vector<8x16xf32>
    %90 = vector.shape_cast %89 : vector<8x16xf32> to vector<1x8x16xf32>
    %cst_48 = arith.constant dense<0.000000e+00> : vector<1xf32>
    %91 = vector.multi_reduction <add>, %90, %cst_48 [1, 2] : vector<1x8x16xf32> to vector<1xf32>
    %92 = vector.shape_cast %91 : vector<1xf32> to vector<1x1x1xf32>
    %93 = vector.extract %92[0, 0, 0] : f32 from vector<1x1x1xf32>
    %cst_49 = arith.constant 7.812500e-03 : f32
    %94 = arith.mulf %93, %cst_49 : f32
    %95 = arith.mulf %89, %89 : vector<8x16xf32>
    %96 = vector.shape_cast %95 : vector<8x16xf32> to vector<1x8x16xf32>
    %cst_50 = arith.constant dense<0.000000e+00> : vector<1xf32>
    %97 = vector.multi_reduction <add>, %96, %cst_50 [1, 2] : vector<1x8x16xf32> to vector<1xf32>
    %98 = vector.shape_cast %97 : vector<1xf32> to vector<1x1x1xf32>
    %99 = vector.extract %98[0, 0, 0] : f32 from vector<1x1x1xf32>
    %cst_51 = arith.constant 7.812500e-03 : f32
    %100 = arith.mulf %99, %cst_51 : f32
    %101 = arith.mulf %94, %94 : f32
    %102 = arith.subf %100, %101 : f32
    %103 = vector.broadcast %94 : f32 to vector<8x16xf32>
    %104 = arith.subf %89, %103 : vector<8x16xf32>
    %cst_52 = arith.constant 9.99999974E-6 : f32
    %105 = arith.addf %102, %cst_52 : f32
    %106 = math.rsqrt %105 : f32
    %107 = vector.broadcast %106 : f32 to vector<8x16xf32>
    %108 = arith.mulf %104, %107 : vector<8x16xf32>
    %c0_53 = arith.constant 0 : index
    %c0_54 = arith.constant 0 : index
    %109 = vector.load %arg8[%c0_53, %c0_54] : memref<8x16xf32, #tpu.memory_space<vmem>>, vector<8x16xf32>
    %110 = arith.mulf %108, %109 : vector<8x16xf32>
    %c0_55 = arith.constant 0 : index
    %c0_56 = arith.constant 0 : index
    %111 = vector.load %arg9[%c0_55, %c0_56] : memref<8x16xf32, #tpu.memory_space<vmem>>, vector<8x16xf32>
    %112 = arith.addf %110, %111 : vector<8x16xf32>
    %113 = arith.addf %88, %112 : vector<8x16xf32>
    %cst_57 = arith.constant 0.000000e+00 : f32
    %114 = vector.broadcast %cst_57 : f32 to vector<8x16xf32>
    %115 = arith.maximumf %113, %114 : vector<8x16xf32>
    %c0_58 = arith.constant 0 : index
    %c0_59 = arith.constant 0 : index
    %c0_60 = arith.constant 0 : index
    %116 = vector.load %arg11[%c0_58, %c0_59, %c0_60] : memref<1x8x16xf32, #tpu.memory_space<vmem>>, vector<1x8x16xf32>
    %117 = vector.shape_cast %116 : vector<1x8x16xf32> to vector<8x16xf32>
    %118 = vector.shape_cast %115 : vector<8x16xf32> to vector<1x8x16xf32>
    tpu.vector_store %arg11[%c0_58, %c0_59, %c0_60], %118 {strides = array<i32>} : memref<1x8x16xf32, #tpu.memory_space<vmem>>, vector<1x8x16xf32>,
    return
  }
  func.func @transform_0(%arg0: i32) -> i32 {
    %c0_i32 = arith.constant 0 : i32
    %c0_i32_0 = arith.constant 0 : i32
    return %c0_i32 : i32
  }
  func.func @transform_1(%arg0: i32) -> (i32, i32, i32) {
    %c0_i32 = arith.constant 0 : i32
    %c0_i32_0 = arith.constant 0 : i32
    %c0_i32_1 = arith.constant 0 : i32
    return %arg0, %c0_i32, %c0_i32_0 : i32, i32, i32
  }
  func.func @transform_2(%arg0: i32) -> (i32, i32, i32) {
    %c0_i32 = arith.constant 0 : i32
    %c0_i32_0 = arith.constant 0 : i32
    %c0_i32_1 = arith.constant 0 : i32
    %c0_i32_2 = arith.constant 0 : i32
    return %c0_i32, %c0_i32_0, %c0_i32_1 : i32, i32, i32
  }
  func.func @transform_3(%arg0: i32) -> (i32, i32) {
    %c0_i32 = arith.constant 0 : i32
    %c0_i32_0 = arith.constant 0 : i32
    %c0_i32_1 = arith.constant 0 : i32
    return %c0_i32, %c0_i32_0 : i32, i32
  }
  func.func @transform_4(%arg0: i32) -> (i32, i32) {
    %c0_i32 = arith.constant 0 : i32
    %c0_i32_0 = arith.constant 0 : i32
    %c0_i32_1 = arith.constant 0 : i32
    return %c0_i32, %c0_i32_0 : i32, i32
  }
  func.func @transform_5(%arg0: i32) -> (i32, i32) {
    %c0_i32 = arith.constant 0 : i32
    %c0_i32_0 = arith.constant 0 : i32
    %c0_i32_1 = arith.constant 0 : i32
    return %c0_i32, %c0_i32_0 : i32, i32
  }
  func.func @transform_6(%arg0: i32) -> (i32, i32) {
    %c0_i32 = arith.constant 0 : i32
    %c0_i32_0 = arith.constant 0 : i32
    %c0_i32_1 = arith.constant 0 : i32
    return %c0_i32, %c0_i32_0 : i32, i32
  }
  func.func @transform_7(%arg0: i32) -> (i32, i32) {
    %c0_i32 = arith.constant 0 : i32
    %c0_i32_0 = arith.constant 0 : i32
    %c0_i32_1 = arith.constant 0 : i32
    return %c0_i32, %c0_i32_0 : i32, i32
  }
  func.func @transform_8(%arg0: i32) -> (i32, i32) {
    %c0_i32 = arith.constant 0 : i32
    %c0_i32_0 = arith.constant 0 : i32
    %c0_i32_1 = arith.constant 0 : i32
    return %c0_i32, %c0_i32_0 : i32, i32
  }
  func.func @transform_9(%arg0: i32) -> (i32, i32, i32) {
    %c0_i32 = arith.constant 0 : i32
    %c0_i32_0 = arith.constant 0 : i32
    %c0_i32_1 = arith.constant 0 : i32
    %c0_i32_2 = arith.constant 0 : i32
    return %c0_i32, %c0_i32_0, %c0_i32_1 : i32, i32, i32
  }
  func.func @transform_10(%arg0: i32) -> (i32, i32, i32) {
    %c0_i32 = arith.constant 0 : i32
    %c0_i32_0 = arith.constant 0 : i32
    %c0_i32_1 = arith.constant 0 : i32
    return %arg0, %c0_i32, %c0_i32_0 : i32, i32, i32
  }
  func.func @transform_11(%arg0: i32) -> (i32, i32, i32) {
    %c0_i32 = arith.constant 0 : i32
    %c0_i32_0 = arith.constant 0 : i32
    %c0_i32_1 = arith.constant 0 : i32
    %c0_i32_2 = arith.constant 0 : i32
    return %c0_i32, %c0_i32_0, %c0_i32_1 : i32, i32, i32
  }
}

</mosaic_0001>

<llo_original>
// kernel: forward.1
$region0: #{forward.1}
  #allocation0 [shape = 'u32[]', space=smem, size = 0x4, offset = 0x4, fixed_abs, tag = 'smem constant byte address 0x4 - core index']
  #allocation1 [shape = 'u32[144,128]{1,0:T(1,128)}', space=vmem, size = 0x12000, scoped, tag = 'internal scratch']
  %s0 = inlined_call_operand.vmem [shape: s32[2], index: 0, kind: input, shape index: {}]
  %s1 = inlined_call_operand.vmem [shape: f32[3,4,16], index: 1, kind: input, shape index: {}]
  %s2 = inlined_call_operand.vmem [shape: f32[3,16,16], index: 2, kind: input, shape index: {}]
  %s3 = inlined_call_operand.vmem [shape: f32[8,16], index: 3, kind: input, shape index: {}]
  %s4 = inlined_call_operand.vmem [shape: f32[32,4], index: 4, kind: input, shape index: {}]
  %s5 = inlined_call_operand.hbm [shape: f32[8,16], index: 5, kind: input, shape index: {}]
  %s6 = inlined_call_operand.hbm [shape: f32[8,16], index: 6, kind: input, shape index: {}]
  %s7 = inlined_call_operand.hbm [shape: f32[8,16], index: 7, kind: input, shape index: {}]
  %s8 = inlined_call_operand.hbm [shape: f32[8,16], index: 8, kind: input, shape index: {}]
  %s9 = inlined_call_operand.vmem [shape: f32[4,8,16], index: 9, kind: input, shape index: {}, may-alias: {9,11}]
  %s10 = inlined_call_operand.hbm [shape: f32[3,8,16], index: 10, kind: output, shape index: {0}]
  %s11 = inlined_call_operand.vmem [shape: f32[4,8,16], index: 11, kind: output, shape index: {1}, may-alias: {9,11}]
  %12 = xla_tuple %s10, %s11
  %s13 = sld [smem:[#allocation0]]
  $region105: #{forward.1} parent=0
    _
  %s15 = ssub.s32 1, %s13
  %s16 = scalar_select 0, %s15, %s13
  $region1: #{forward.1} parent=0
    #allocation2 [shape = 'u8[512]{0}', space=smem, size = 0x200, scoped, tag = 'input window, operand 0, single buffered']
    #allocation3 [shape = 's32[2]{0}', space=sflag, size = 0x8, scoped, tag = 'scoped memory for forward.1']
    #allocation4 [shape = 's32[2]{0}', space=sflag, size = 0x8, scoped, tag = 'scoped memory for forward.1']
    #allocation5 [shape = 's32[2]{0}', space=sflag, size = 0x8, scoped, tag = 'scoped memory for forward.1']
    #allocation6 [shape = 'u8[4096]{0}', space=vmem, size = 0x1000, scoped, tag = 'input window, operand 5, single buffered']
    #allocation7 [shape = 'u8[4096]{0}', space=vmem, size = 0x1000, scoped, tag = 'input window, operand 6, single buffered']
    #allocation8 [shape = 's32[1]{0}', space=sflag, size = 0x4, scoped, tag = 'scoped memory for forward.1']
    #allocation9 [shape = 'u8[4096]{0}', space=vmem, size = 0x1000, scoped, tag = 'input window, operand 7, single buffered']
    #allocation10 [shape = 'u8[4096]{0}', space=vmem, size = 0x1000, scoped, tag = 'input window, operand 8, single buffered']
    #allocation11 [shape = 's32[1]{0}', space=sflag, size = 0x4, scoped, tag = 'scoped memory for forward.1']
    #allocation12 [shape = 'u8[8192]{0}', space=vmem, size = 0x2000, scoped, tag = 'output window, operand 0']
    %17 = vsyncpa [#allocation5], 0
    %18 = vsyncpa [#allocation3], 0
    %19 = vsyncpa [#allocation8], 0
    %20 = vsyncpa [#allocation11], 0
    %21 = vsyncpa [#allocation4], 0
    %s22 = scalar_lea.sflag [#allocation4], 1
    %23 = vsyncpa %s22, 0
    loop: start=0, step=1, limit=5
    $region2: #{forward.1} parent=1 // loop_pre_header
      _
    $region3: #{forward.1} parent=1 // loop_header
      %s25 = sphi 0, %s29
      %p26 = scmp.ge.s32.totalorder %s25, 5
      %s33 = sphi 0, %s33
      %s35 = sphi 0, %s33
      %s36 = sphi 0, %s35
      %s50 = sphi 0, %s36
      %s56 = sphi 0, %s58
      %s59 = sphi 0, %s56
      %s60 = sphi 0, %s59
      %s76 = sphi 0, %s60
      %s80 = sphi 0, %s80
      %s82 = sphi 0, %s80
      %s83 = sphi 0, %s82
      %s97 = sphi 0, %s83
      %s101 = sphi 0, %s101
      %s103 = sphi 0, %s101
      %s104 = sphi 0, %s103
      %s118 = sphi 0, %s104
      %s122 = sphi 0, %s122
      %s124 = sphi 0, %s122
      %s125 = sphi 0, %s124
      %s139 = sphi 0, %s125
      %s143 = sphi 0, %s143
      %s145 = sphi 0, %s143
      %s146 = sphi 0, %s145
      %s160 = sphi 0, %s146
      %s164 = sphi 0, %s164
      %s166 = sphi 0, %s164
      %s167 = sphi 0, %s166
      %s181 = sphi 0, %s167
      %s185 = sphi 0, %s185
      %s187 = sphi 0, %s185
      %s188 = sphi 0, %s187
      %s202 = sphi 0, %s188
      %s206 = sphi 0, %s206
      %s208 = sphi 0, %s206
      %s209 = sphi 0, %s208
      %s223 = sphi 0, %s209
      %s227 = sphi 0, %s227
      %s229 = sphi 0, %s227
      %s230 = sphi 0, %s229
      %s244 = sphi 0, %s230
      %s250 = sphi 0, %s252
      %s253 = sphi 0, %s250
      %s254 = sphi 0, %s253
      %s270 = sphi 0, %s254
      %s274 = sphi 0, %s274
      %s276 = sphi 0, %s274
      %s277 = sphi 0, %s276
      %s291 = sphi 0, %s277
    $region4: #{forward.1} parent=1 // loop_header_branch
      %28 = sbr.rel (%p26) target = $region8
    $region5: #{forward.1} parent=1 // loop_body
      %s30 = ssub.s32 %s25, 1
      %s31 = ssub.s32 %s25, 2
      %s32 = sadd.s32 %s25, 1
      %s34 = sadd.s32 %s33, 1
      %p37 = scmp.eq.s32.totalorder %s25, 2
      %p38 = scmp.ne.s32.totalorder %s33, %s35
      %p39 = scmp.eq.s32.totalorder %s25, 0
      %p40 = por %p38, %p39
      %p41 = scmp.ne.s32.totalorder %s33, %s35
      %p42 = scmp.eq.s32.totalorder %s30, 2
      %p43 = por %p41, %p42
      %p44 = scmp.ne.s32.totalorder %s35, %s36
      %p45 = scmp.eq.s32.totalorder %s30, 0
      %p46 = por %p44, %p45
      %p47 = scmp.ne.s32.totalorder %s35, %s36
      %p48 = scmp.eq.s32.totalorder %s31, 2
      %p49 = por %p47, %p48
      %p51 = scmp.ne.s32.totalorder %s36, %s50
      %p52 = scmp.eq.s32.totalorder %s31, 0
      %p53 = por %p51, %p52
      %s54 = ssub.s32 %s25, %s32
      %p55 = scmp.eq.s32.totalorder %s54, 0
      %s57 = sadd.s32 %s56, 1
      %s58 = scalar_select %p55, %s56, %s57
      %p61 = pneg %p55
      %p62 = scmp.eq.s32.totalorder %s25, 2
      %p63 = por %p61, %p62
      %p64 = scmp.ne.s32.totalorder %s56, %s59
      %p65 = scmp.eq.s32.totalorder %s25, 0
      %p66 = por %p64, %p65
      %p67 = scmp.ne.s32.totalorder %s56, %s59
      %p68 = scmp.eq.s32.totalorder %s30, 2
      %p69 = por %p67, %p68
      %p70 = scmp.ne.s32.totalorder %s59, %s60
      %p71 = scmp.eq.s32.totalorder %s30, 0
      %p72 = por %p70, %p71
      %p73 = scmp.ne.s32.totalorder %s59, %s60
      %p74 = scmp.eq.s32.totalorder %s31, 2
      %p75 = por %p73, %p74
      %p77 = scmp.ne.s32.totalorder %s60, %s76
      %p78 = scmp.eq.s32.totalorder %s31, 0
      %p79 = por %p77, %p78
      %s81 = sadd.s32 %s80, 1
      %p84 = scmp.eq.s32.totalorder %s25, 2
      %p85 = scmp.ne.s32.totalorder %s80, %s82
      %p86 = scmp.eq.s32.totalorder %s25, 0
      %p87 = por %p85, %p86
      %p88 = scmp.ne.s32.totalorder %s80, %s82
      %p89 = scmp.eq.s32.totalorder %s30, 2
      %p90 = por %p88, %p89
      %p91 = scmp.ne.s32.totalorder %s82, %s83
      %p92 = scmp.eq.s32.totalorder %s30, 0
      %p93 = por %p91, %p92
      %p94 = scmp.ne.s32.totalorder %s82, %s83
      %p95 = scmp.eq.s32.totalorder %s31, 2
      %p96 = por %p94, %p95
      %p98 = scmp.ne.s32.totalorder %s83, %s97
      %p99 = scmp.eq.s32.totalorder %s31, 0
      %p100 = por %p98, %p99
      %s102 = sadd.s32 %s101, 1
      %p105 = scmp.eq.s32.totalorder %s25, 2
      %p106 = scmp.ne.s32.totalorder %s101, %s103
      %p107 = scmp.eq.s32.totalorder %s25, 0
      %p108 = por %p106, %p107
      %p109 = scmp.ne.s32.totalorder %s101, %s103
      %p110 = scmp.eq.s32.totalorder %s30, 2
      %p111 = por %p109, %p110
      %p112 = scmp.ne.s32.totalorder %s103, %s104
      %p113 = scmp.eq.s32.totalorder %s30, 0
      %p114 = por %p112, %p113
      %p115 = scmp.ne.s32.totalorder %s103, %s104
      %p116 = scmp.eq.s32.totalorder %s31, 2
      %p117 = por %p115, %p116
      %p119 = scmp.ne.s32.totalorder %s104, %s118
      %p120 = scmp.eq.s32.totalorder %s31, 0
      %p121 = por %p119, %p120
      %s123 = sadd.s32 %s122, 1
      %p126 = scmp.eq.s32.totalorder %s25, 2
      %p127 = scmp.ne.s32.totalorder %s122, %s124
      %p128 = scmp.eq.s32.totalorder %s25, 0
      %p129 = por %p127, %p128
      %p130 = scmp.ne.s32.totalorder %s122, %s124
      %p131 = scmp.eq.s32.totalorder %s30, 2
      %p132 = por %p130, %p131
      %p133 = scmp.ne.s32.totalorder %s124, %s125
      %p134 = scmp.eq.s32.totalorder %s30, 0
      %p135 = por %p133, %p134
      %p136 = scmp.ne.s32.totalorder %s124, %s125
      %p137 = scmp.eq.s32.totalorder %s31, 2
      %p138 = por %p136, %p137
      %p140 = scmp.ne.s32.totalorder %s125, %s139
      %p141 = scmp.eq.s32.totalorder %s31, 0
      %p142 = por %p140, %p141
      %s144 = sadd.s32 %s143, 1
      %p147 = scmp.eq.s32.totalorder %s25, 2
      %p148 = scmp.ne.s32.totalorder %s143, %s145
      %p149 = scmp.eq.s32.totalorder %s25, 0
      %p150 = por %p148, %p149
      %p151 = scmp.ne.s32.totalorder %s143, %s145
      %p152 = scmp.eq.s32.totalorder %s30, 2
      %p153 = por %p151, %p152
      %p154 = scmp.ne.s32.totalorder %s145, %s146
      %p155 = scmp.eq.s32.totalorder %s30, 0
      %p156 = por %p154, %p155
      %p157 = scmp.ne.s32.totalorder %s145, %s146
      %p158 = scmp.eq.s32.totalorder %s31, 2
      %p159 = por %p157, %p158
      %p161 = scmp.ne.s32.totalorder %s146, %s160
      %p162 = scmp.eq.s32.totalorder %s31, 0
      %p163 = por %p161, %p162
      %s165 = sadd.s32 %s164, 1
      %p168 = scmp.eq.s32.totalorder %s25, 2
      %p169 = scmp.ne.s32.totalorder %s164, %s166
      %p170 = scmp.eq.s32.totalorder %s25, 0
      %p171 = por %p169, %p170
      %p172 = scmp.ne.s32.totalorder %s164, %s166
      %p173 = scmp.eq.s32.totalorder %s30, 2
      %p174 = por %p172, %p173
      %p175 = scmp.ne.s32.totalorder %s166, %s167
      %p176 = scmp.eq.s32.totalorder %s30, 0
      %p177 = por %p175, %p176
      %p178 = scmp.ne.s32.totalorder %s166, %s167
      %p179 = scmp.eq.s32.totalorder %s31, 2
      %p180 = por %p178, %p179
      %p182 = scmp.ne.s32.totalorder %s167, %s181
      %p183 = scmp.eq.s32.totalorder %s31, 0
      %p184 = por %p182, %p183
      %s186 = sadd.s32 %s185, 1
      %p189 = scmp.eq.s32.totalorder %s25, 2
      %p190 = scmp.ne.s32.totalorder %s185, %s187
      %p191 = scmp.eq.s32.totalorder %s25, 0
      %p192 = por %p190, %p191
      %p193 = scmp.ne.s32.totalorder %s185, %s187
      %p194 = scmp.eq.s32.totalorder %s30, 2
      %p195 = por %p193, %p194
      %p196 = scmp.ne.s32.totalorder %s187, %s188
      %p197 = scmp.eq.s32.totalorder %s30, 0
      %p198 = por %p196, %p197
      %p199 = scmp.ne.s32.totalorder %s187, %s188
      %p200 = scmp.eq.s32.totalorder %s31, 2
      %p201 = por %p199, %p200
      %p203 = scmp.ne.s32.totalorder %s188, %s202
      %p204 = scmp.eq.s32.totalorder %s31, 0
      %p205 = por %p203, %p204
      %s207 = sadd.s32 %s206, 1
      %p210 = scmp.eq.s32.totalorder %s25, 2
      %p211 = scmp.ne.s32.totalorder %s206, %s208
      %p212 = scmp.eq.s32.totalorder %s25, 0
      %p213 = por %p211, %p212
      %p214 = scmp.ne.s32.totalorder %s206, %s208
      %p215 = scmp.eq.s32.totalorder %s30, 2
      %p216 = por %p214, %p215
      %p217 = scmp.ne.s32.totalorder %s208, %s209
      %p218 = scmp.eq.s32.totalorder %s30, 0
      %p219 = por %p217, %p218
      %p220 = scmp.ne.s32.totalorder %s208, %s209
      %p221 = scmp.eq.s32.totalorder %s31, 2
      %p222 = por %p220, %p221
      %p224 = scmp.ne.s32.totalorder %s209, %s223
      %p225 = scmp.eq.s32.totalorder %s31, 0
      %p226 = por %p224, %p225
      %s228 = sadd.s32 %s227, 1
      %p231 = scmp.eq.s32.totalorder %s25, 2
      %p232 = scmp.ne.s32.totalorder %s227, %s229
      %p233 = scmp.eq.s32.totalorder %s25, 0
      %p234 = por %p232, %p233
      %p235 = scmp.ne.s32.totalorder %s227, %s229
      %p236 = scmp.eq.s32.totalorder %s30, 2
      %p237 = por %p235, %p236
      %p238 = scmp.ne.s32.totalorder %s229, %s230
      %p239 = scmp.eq.s32.totalorder %s30, 0
      %p240 = por %p238, %p239
      %p241 = scmp.ne.s32.totalorder %s229, %s230
      %p242 = scmp.eq.s32.totalorder %s31, 2
      %p243 = por %p241, %p242
      %p245 = scmp.ne.s32.totalorder %s230, %s244
      %p246 = scmp.eq.s32.totalorder %s31, 0
      %p247 = por %p245, %p246
      %s248 = ssub.s32 %s25, %s32
      %p249 = scmp.eq.s32.totalorder %s248, 0
      %s251 = sadd.s32 %s250, 1
      %s252 = scalar_select %p249, %s250, %s251
      %p255 = pneg %p249
      %p256 = scmp.eq.s32.totalorder %s25, 2
      %p257 = por %p255, %p256
      %p258 = scmp.ne.s32.totalorder %s250, %s253
      %p259 = scmp.eq.s32.totalorder %s25, 0
      %p260 = por %p258, %p259
      %p261 = scmp.ne.s32.totalorder %s250, %s253
      %p262 = scmp.eq.s32.totalorder %s30, 2
      %p263 = por %p261, %p262
      %p264 = scmp.ne.s32.totalorder %s253, %s254
      %p265 = scmp.eq.s32.totalorder %s30, 0
      %p266 = por %p264, %p265
      %p267 = scmp.ne.s32.totalorder %s253, %s254
      %p268 = scmp.eq.s32.totalorder %s31, 2
      %p269 = por %p267, %p268
      %p271 = scmp.ne.s32.totalorder %s254, %s270
      %p272 = scmp.eq.s32.totalorder %s31, 0
      %p273 = por %p271, %p272
      %s275 = sadd.s32 %s274, 1
      %p278 = scmp.eq.s32.totalorder %s25, 2
      %p279 = scmp.ne.s32.totalorder %s274, %s276
      %p280 = scmp.eq.s32.totalorder %s25, 0
      %p281 = por %p279, %p280
      %p282 = scmp.ne.s32.totalorder %s274, %s276
      %p283 = scmp.eq.s32.totalorder %s30, 2
      %p284 = por %p282, %p283
      %p285 = scmp.ne.s32.totalorder %s276, %s277
      %p286 = scmp.eq.s32.totalorder %s30, 0
      %p287 = por %p285, %p286
      %p288 = scmp.ne.s32.totalorder %s276, %s277
      %p289 = scmp.eq.s32.totalorder %s31, 2
      %p290 = por %p288, %p289
      %p292 = scmp.ne.s32.totalorder %s277, %s291
      %p293 = scmp.eq.s32.totalorder %s31, 0
      %p294 = por %p292, %p293
      %p295 = scmp.le.s32.totalorder 1, %s25
      %p296 = scmp.lt.s32.totalorder %s25, 4
      %p297 = pnand %p295, %p296
      %p298 = pneg %p297
      // Predicated region
      $region9: #{forward.1} parent=5 // pred_check
        _
      $region10: #{forward.1} parent=5 // pred_check_branch
        %300 = sbr.rel (%p297) target = $region12
      $region11: #{forward.1} parent=5 // pred_region
        %s301 = ssub.s32 %s25, 1
        // Predicated region
        $region13: #{forward.1} parent=11 // pred_check
          %p302 = pneg %p46
        $region14: #{forward.1} parent=11 // pred_check_branch
          %304 = sbr.rel (%p302) target = $region16
        $region15: #{forward.1} parent=11 // pred_region
          %s306 = ssub.s32 16, 16
          %307 = vsyncadd [#allocation5], %s306
          %s309 = sshll.u32 %s0, 4
          %s310 = int_to_ptr.vmem [resolvable:$true] %s309
          %312 = dma.vmem_to_smem %s310, 16, [#allocation2], [#allocation5]
        $region16: #{forward.1} parent=11 // pred_fallthru
          _
        // Predicated region
        $region17: #{forward.1} parent=11 // pred_check
          %p313 = pneg %p93
        $region18: #{forward.1} parent=11 // pred_check_branch
          %315 = sbr.rel (%p313) target = $region20
        $region19: #{forward.1} parent=11 // pred_region
          _
        $region20: #{forward.1} parent=11 // pred_fallthru
          _
        // Predicated region
        $region21: #{forward.1} parent=11 // pred_check
          %p316 = pneg %p114
        $region22: #{forward.1} parent=11 // pred_check_branch
          %318 = sbr.rel (%p316) target = $region24
        $region23: #{forward.1} parent=11 // pred_region
          _
        $region24: #{forward.1} parent=11 // pred_fallthru
          _
        // Predicated region
        $region25: #{forward.1} parent=11 // pred_check
          %p319 = pneg %p135
        $region26: #{forward.1} parent=11 // pred_check_branch
          %321 = sbr.rel (%p319) target = $region28
        $region27: #{forward.1} parent=11 // pred_region
          _
        $region28: #{forward.1} parent=11 // pred_fallthru
          _
        // Predicated region
        $region29: #{forward.1} parent=11 // pred_check
          %p322 = pneg %p156
        $region30: #{forward.1} parent=11 // pred_check_branch
          %324 = sbr.rel (%p322) target = $region32
        $region31: #{forward.1} parent=11 // pred_region
          %s326 = ssub.s32 128, 128
          %327 = vsyncadd [#allocation3], %s326
          %s329 = sshll.u32 [#allocation6], 4
          %s330 = int_to_ptr.vmem [resolvable:$true] %s329
          %332 = dma.hbm_to_vmem [thread:$0]  %s5, 128, %s330, [#allocation3]
        $region32: #{forward.1} parent=11 // pred_fallthru
          _
        // Predicated region
        $region33: #{forward.1} parent=11 // pred_check
          %p333 = pneg %p177
        $region34: #{forward.1} parent=11 // pred_check_branch
          %335 = sbr.rel (%p333) target = $region36
        $region35: #{forward.1} parent=11 // pred_region
          %s337 = ssub.s32 128, 128
          %338 = vsyncadd [#allocation8], %s337
          %s340 = sshll.u32 [#allocation7], 4
          %s341 = int_to_ptr.vmem [resolvable:$true] %s340
          %343 = dma.hbm_to_vmem [thread:$0]  %s6, 128, %s341, [#allocation8]
        $region36: #{forward.1} parent=11 // pred_fallthru
          _
        // Predicated region
        $region37: #{forward.1} parent=11 // pred_check
          %p344 = pneg %p198
        $region38: #{forward.1} parent=11 // pred_check_branch
          %346 = sbr.rel (%p344) target = $region40
        $region39: #{forward.1} parent=11 // pred_region
          %s348 = ssub.s32 128, 128
          %349 = vsyncadd [#allocation8], %s348
          %s351 = sshll.u32 [#allocation9], 4
          %s352 = int_to_ptr.vmem [resolvable:$true] %s351
          %354 = dma.hbm_to_vmem [thread:$0]  %s7, 128, %s352, [#allocation8]
        $region40: #{forward.1} parent=11 // pred_fallthru
          _
        // Predicated region
        $region41: #{forward.1} parent=11 // pred_check
          %p355 = pneg %p219
        $region42: #{forward.1} parent=11 // pred_check_branch
          %357 = sbr.rel (%p355) target = $region44
        $region43: #{forward.1} parent=11 // pred_region
          %s359 = ssub.s32 128, 128
          %360 = vsyncadd [#allocation11], %s359
          %s362 = sshll.u32 [#allocation10], 4
          %s363 = int_to_ptr.vmem [resolvable:$true] %s362
          %365 = dma.hbm_to_vmem [thread:$0]  %s8, 128, %s363, [#allocation11]
        $region44: #{forward.1} parent=11 // pred_fallthru
          _
        // Predicated region
        $region45: #{forward.1} parent=11 // pred_check
          %p366 = pneg %p240
        $region46: #{forward.1} parent=11 // pred_check_branch
          %368 = sbr.rel (%p366) target = $region48
        $region47: #{forward.1} parent=11 // pred_region
          _
        $region48: #{forward.1} parent=11 // pred_fallthru
          _
      $region12: #{forward.1} parent=5 // pred_fallthru
        _
      %p369 = scmp.lt.s32.totalorder %s25, 3
      // Predicated region
      $region49: #{forward.1} parent=5 // pred_check
        %p370 = pneg %p369
      $region50: #{forward.1} parent=5 // pred_check_branch
        %372 = sbr.rel (%p370) target = $region52
      $region51: #{forward.1} parent=5 // pred_region
        // Predicated region
        $region53: #{forward.1} parent=51 // pred_check
          %p373 = pneg %p66
        $region54: #{forward.1} parent=51 // pred_check_branch
          %375 = sbr.rel (%p373) target = $region56
        $region55: #{forward.1} parent=51 // pred_region
          %p376 = scmp.lt.s32.totalorder %s25, 2
          %s377 = scalar_select %p376, %s25, 2
          %s378 = smul.addr %s377, 4
          %s379 = scalar_lea.vmem %s1, %s378
        $region56: #{forward.1} parent=51 // pred_fallthru
          _
      $region52: #{forward.1} parent=5 // pred_fallthru
        _
      %p380 = scmp.le.s32.totalorder 1, %s25
      %p381 = scmp.lt.s32.totalorder %s25, 4
      %p382 = pnand %p380, %p381
      %p383 = pneg %p382
      // Predicated region
      $region57: #{forward.1} parent=5 // pred_check
        _
      $region58: #{forward.1} parent=5 // pred_check_branch
        %385 = sbr.rel (%p382) target = $region60
      $region59: #{forward.1} parent=5 // pred_region
        %s386 = ssub.s32 %s25, 1
        // Predicated region
        $region61: #{forward.1} parent=59 // pred_check
          %p387 = pneg %p46
        $region62: #{forward.1} parent=59 // pred_check_branch
          %389 = sbr.rel (%p387) target = $region64
        $region63: #{forward.1} parent=59 // pred_region
          %390 = dma.done [#allocation5], 16
        $region64: #{forward.1} parent=59 // pred_fallthru
          _
        // Predicated region
        $region65: #{forward.1} parent=59 // pred_check
          %p391 = pneg %p156
        $region66: #{forward.1} parent=59 // pred_check_branch
          %393 = sbr.rel (%p391) target = $region68
        $region67: #{forward.1} parent=59 // pred_region
          %394 = dma.done [#allocation3], 128
        $region68: #{forward.1} parent=59 // pred_fallthru
          _
        // Predicated region
        $region69: #{forward.1} parent=59 // pred_check
          %p395 = pneg %p177
        $region70: #{forward.1} parent=59 // pred_check_branch
          %397 = sbr.rel (%p395) target = $region72
        $region71: #{forward.1} parent=59 // pred_region
          %398 = dma.done [#allocation8], 128
        $region72: #{forward.1} parent=59 // pred_fallthru
          _
        // Predicated region
        $region73: #{forward.1} parent=59 // pred_check
          %p399 = pneg %p198
        $region74: #{forward.1} parent=59 // pred_check_branch
          %401 = sbr.rel (%p399) target = $region76
        $region75: #{forward.1} parent=59 // pred_region
          %402 = dma.done [#allocation8], 128
        $region76: #{forward.1} parent=59 // pred_fallthru
          _
        // Predicated region
        $region77: #{forward.1} parent=59 // pred_check
          %p403 = pneg %p219
        $region78: #{forward.1} parent=59 // pred_check_branch
          %405 = sbr.rel (%p403) target = $region80
        $region79: #{forward.1} parent=59 // pred_region
          %406 = dma.done [#allocation11], 128
        $region80: #{forward.1} parent=59 // pred_fallthru
          _
        %407 = sfence
        %p408 = pneg %p46
        %p409 = pneg %p43
        %p410 = scmp.lt.s32.totalorder %s30, 2
        %s411 = scalar_select %p410, %s30, 2
        %s412 = smul.addr %s411, 4
        %s413 = scalar_lea.vmem %s1, %s412
        %p414 = pneg %p72
        %p415 = pneg %p69
        %p416 = pneg %p93
        %p417 = pneg %p90
        %p418 = pneg %p114
        %p419 = pneg %p111
        %p420 = pneg %p135
        %p421 = pneg %p132
        %p422 = pneg %p156
        %p423 = pneg %p153
        %p424 = pneg %p177
        %p425 = pneg %p174
        %p426 = pneg %p198
        %p427 = pneg %p195
        %p428 = pneg %p219
        %p429 = pneg %p216
        %p430 = pneg %p240
        %p431 = pneg %p237
        %p432 = pneg %p266
        %p433 = pneg %p263
        %s434 = sand.u32 %s253, 1
        %s435 = scalar_lea.sflag [#allocation4], %s434
        %s436 = sand.u32 %s253, 1
        %s437 = smul.addr %s436, 8
        %s438 = scalar_lea.vmem [#allocation12], %s437
        %p439 = pneg %p287
        %p440 = pneg %p284
        %p441 = scmp.lt.s32.totalorder %s30, 2
        %s442 = scalar_select %p441, %s30, 2
        %s443 = smul.addr %s442, 4
        %s444 = scalar_lea.vmem %s1, %s443
        %p445 = scmp.eq.s32.totalorder %s30, 0
        // Predicated region
        $region81: #{forward.1} parent=59 // pred_check
          %p446 = pneg %p445
        $region82: #{forward.1} parent=59 // pred_check_branch
          %448 = sbr.rel (%p446) target = $region84
        $region83: #{forward.1} parent=59 // pred_region
          %v449 = vld [vmem:[%s9] sm:$0xff]
          %v450 = vld [vmem:[%s9 + $0x8] sm:$0xff]
          %v451 = vld [vmem:[%s9 + $0x10] sm:$0xff]
          %v452 = vld [vmem:[%s9 + $0x18] sm:$0xff]
          %vm453 = vcmask 130048
          %454 = vst.msk [vmem:[%s11] sm:$0xff] %vm453, %v449
          %455 = vst.msk [vmem:[%s11 + $0x8] sm:$0xff] %vm453, %v450
          %456 = vst.msk [vmem:[%s11 + $0x10] sm:$0xff] %vm453, %v451
          %457 = vst.msk [vmem:[%s11 + $0x18] sm:$0xff] %vm453, %v452
        $region84: #{forward.1} parent=59 // pred_fallthru
          _
        %v458 = vld [vmem:[%s444] sm:$0xf]
        %v459 = vld [vmem:[%s4] sm:$0xff]
        %v460 = vld [vmem:[%s4 + $0x8] sm:$0xff]
        %v461 = vld [vmem:[%s4 + $0x10] sm:$0xff]
        %v462 = vld [vmem:[%s4 + $0x18] sm:$0xff]
        %vm463 = vcmask 31744
        %v465 = vsel %vm463, %v459, 0
        %v468 = vsel %vm463, %v460, 0
        %v471 = vsel %vm463, %v461, 0
        %v474 = vsel %vm463, %v462, 0
        %vm476 = vcmask 1043456
        %v478 = vsel %vm476, %v458, 0
        %480 = vmatprep.subr.mxu0 0.0
        %481 = vmatpush1.msra.mxu0 %v478
        %482 = vmatprep.subr.mxu0 0.0
        %483 = vmatpush1.msra.mxu0 0.0
        %484 = vmatprep.subr.mxu0 0.0
        %485 = vmatpush1.msra.mxu0 0.0
        %486 = vmatprep.subr.mxu0 0.0
        %487 = vmatpush1.msra.mxu0 0.0
        %488 = vmatprep.subr.mxu0 0.0
        %489 = vmatpush1.msra.mxu0 0.0
        %490 = vmatprep.subr.mxu0 0.0
        %491 = vmatpush1.msra.mxu0 0.0
        %492 = vmatprep.subr.mxu0 0.0
        %493 = vmatpush1.msra.mxu0 0.0
        %494 = vmatprep.subr.mxu0 0.0
        %495 = vmatpush1.msra.mxu0 0.0
        %496 = vmatprep.subr.mxu0 0.0
        %497 = vmatpush1.msra.mxu0 0.0
        %498 = vmatprep.subr.mxu0 0.0
        %499 = vmatpush1.msra.mxu0 0.0
        %500 = vmatprep.subr.mxu0 0.0
        %501 = vmatpush1.msra.mxu0 0.0
        %502 = vmatprep.subr.mxu0 0.0
        %503 = vmatpush1.msra.mxu0 0.0
        %504 = vmatprep.subr.mxu0 0.0
        %505 = vmatpush1.msra.mxu0 0.0
        %506 = vmatprep.subr.mxu0 0.0
        %507 = vmatpush1.msra.mxu0 0.0
        %508 = vmatprep.subr.mxu0 0.0
        %509 = vmatpush1.msra.mxu0 0.0
        %510 = vmatprep.subr.mxu0 0.0
        %511 = vmatpush1.msra.mxu0 0.0
        %512 = vmatprep.subr.mxu0 0.0
        %513 = vmatpush1.msra.mxu0 0.0
        %514 = vmatprep.subr.mxu0 0.0
        %515 = vmatpush1.msra.mxu0 0.0
        %516 = vmatprep.subr.mxu0 0.0
        %517 = vmatpush1.msra.mxu0 0.0
        %518 = vmatprep.subr.mxu0 0.0
        %519 = vmatpush1.msra.mxu0 0.0
        %520 = vmatprep.subr.mxu0 0.0
        %521 = vmatpush1.msra.mxu0 0.0
        %522 = vmatprep.subr.mxu0 0.0
        %523 = vmatpush1.msra.mxu0 0.0
        %524 = vmatprep.subr.mxu0 0.0
        %525 = vmatpush1.msra.mxu0 0.0
        %526 = vmatprep.subr.mxu0 0.0
        %527 = vmatpush1.msra.mxu0 0.0
        %528 = vmatprep.subr.mxu0 0.0
        %529 = vmatpush1.msra.mxu0 0.0
        %530 = vmatprep.subr.mxu0 0.0
        %531 = vmatpush1.msra.mxu0 0.0
        %532 = vmatprep.subr.mxu0 0.0
        %533 = vmatpush1.msra.mxu0 0.0
        %534 = vmatprep.subr.mxu0 0.0
        %535 = vmatpush1.msra.mxu0 0.0
        %536 = vmatprep.subr.mxu0 0.0
        %537 = vmatpush1.msra.mxu0 0.0
        %538 = vmatprep.subr.mxu0 0.0
        %539 = vmatpush1.msra.mxu0 0.0
        %540 = vmatprep.subr.mxu0 0.0
        %541 = vmatpush1.msra.mxu0 0.0
        %542 = vmatprep.subr.mxu0 0.0
        %543 = vmatpush1.msra.mxu0 0.0
        %544 = vmatprep.mubr.f32.mxu0 0.0
        %545 = vmatmul.mubr.f32.gmra.mrb[0].mxu0 %v465
        %v546 = vpop.f32.mrb[0].mxu0
        %v547 = vadd.f32 0.0, %v546
        %v548 = vpop.f32.mrb[0].mxu0
        %549 = vmatprep.mubr.f32.mxu0 0.0
        %550 = vmatmul.mubr.f32.gmra.mrb[0].mxu0 %v468
        %v551 = vpop.f32.mrb[0].mxu0
        %v552 = vadd.f32 0.0, %v551
        %v553 = vpop.f32.mrb[0].mxu0
        %554 = vmatprep.mubr.f32.mxu0 0.0
        %555 = vmatmul.mubr.f32.gmra.mrb[0].mxu0 %v471
        %v556 = vpop.f32.mrb[0].mxu0
        %v557 = vadd.f32 0.0, %v556
        %v558 = vpop.f32.mrb[0].mxu0
        %559 = vmatprep.mubr.f32.mxu0 0.0
        %560 = vmatmul.mubr.f32.gmra.mrb[0].mxu0 %v474
        %v561 = vpop.f32.mrb[0].mxu0
        %v562 = vadd.f32 0.0, %v561
        %v563 = vpop.f32.mrb[0].mxu0
        %564 = vdwg.mxu0
        %v565 = vld [vmem:[%s3] sm:$0xff]
        %v566 = vld [vmem:[%s2] sm:$0xff]
        %v567 = vld [vmem:[%s2 + $0x8] sm:$0xff]
        %vm568 = vcmask 130048
        %v570 = vsel %vm568, %v547, 0
        %572 = vmatprep.subr.mxu0 0.0
        %573 = vmatpush1.msra.mxu0 %v566
        %574 = vmatprep.subr.mxu0 0.0
        %575 = vmatpush1.msra.mxu0 %v567
        %576 = vmatprep.subr.mxu0 0.0
        %577 = vmatpush1.msra.mxu0 0.0
        %578 = vmatprep.subr.mxu0 0.0
        %579 = vmatpush1.msra.mxu0 0.0
        %580 = vmatprep.subr.mxu0 0.0
        %581 = vmatpush1.msra.mxu0 0.0
        %582 = vmatprep.subr.mxu0 0.0
        %583 = vmatpush1.msra.mxu0 0.0
        %584 = vmatprep.subr.mxu0 0.0
        %585 = vmatpush1.msra.mxu0 0.0
        %586 = vmatprep.subr.mxu0 0.0
        %587 = vmatpush1.msra.mxu0 0.0
        %588 = vmatprep.subr.mxu0 0.0
        %589 = vmatpush1.msra.mxu0 0.0
        %590 = vmatprep.subr.mxu0 0.0
        %591 = vmatpush1.msra.mxu0 0.0
        %592 = vmatprep.subr.mxu0 0.0
        %593 = vmatpush1.msra.mxu0 0.0
        %594 = vmatprep.subr.mxu0 0.0
        %595 = vmatpush1.msra.mxu0 0.0
        %596 = vmatprep.subr.mxu0 0.0
        %597 = vmatpush1.msra.mxu0 0.0
        %598 = vmatprep.subr.mxu0 0.0
        %599 = vmatpush1.msra.mxu0 0.0
        %600 = vmatprep.subr.mxu0 0.0
        %601 = vmatpush1.msra.mxu0 0.0
        %602 = vmatprep.subr.mxu0 0.0
        %603 = vmatpush1.msra.mxu0 0.0
        %604 = vmatprep.subr.mxu0 0.0
        %605 = vmatpush1.msra.mxu0 0.0
        %606 = vmatprep.subr.mxu0 0.0
        %607 = vmatpush1.msra.mxu0 0.0
        %608 = vmatprep.subr.mxu0 0.0
        %609 = vmatpush1.msra.mxu0 0.0
        %610 = vmatprep.subr.mxu0 0.0
        %611 = vmatpush1.msra.mxu0 0.0
        %612 = vmatprep.subr.mxu0 0.0
        %613 = vmatpush1.msra.mxu0 0.0
        %614 = vmatprep.subr.mxu0 0.0
        %615 = vmatpush1.msra.mxu0 0.0
        %616 = vmatprep.subr.mxu0 0.0
        %617 = vmatpush1.msra.mxu0 0.0
        %618 = vmatprep.subr.mxu0 0.0
        %619 = vmatpush1.msra.mxu0 0.0
        %620 = vmatprep.subr.mxu0 0.0
        %621 = vmatpush1.msra.mxu0 0.0
        %622 = vmatprep.subr.mxu0 0.0
        %623 = vmatpush1.msra.mxu0 0.0
        %624 = vmatprep.subr.mxu0 0.0
        %625 = vmatpush1.msra.mxu0 0.0
        %626 = vmatprep.subr.mxu0 0.0
        %627 = vmatpush1.msra.mxu0 0.0
        %628 = vmatprep.subr.mxu0 0.0
        %629 = vmatpush1.msra.mxu0 0.0
        %630 = vmatprep.subr.mxu0 0.0
        %631 = vmatpush1.msra.mxu0 0.0
        %632 = vmatprep.subr.mxu0 0.0
        %633 = vmatpush1.msra.mxu0 0.0
        %634 = vmatprep.subr.mxu0 0.0
        %635 = vmatpush1.msra.mxu0 0.0
        %636 = vmatprep.mubr.f32.mxu0 0.0
        %637 = vmatmul.mubr.f32.gmra.mrb[0].mxu0 %v570
        %v638 = vpop.f32.mrb[0].mxu0
        %v639 = vadd.f32 0.0, %v638
        %v640 = vpop.f32.mrb[0].mxu0
        %641 = vdwg.mxu0
        %v642 = vadd.f32 %v565, %v639
        %s643 = scalar_lea.vmem %s2, 16
        %v644 = vld [vmem:[%s643] sm:$0xff]
        %v645 = vld [vmem:[%s643 + $0x8] sm:$0xff]
        %v647 = vsel %vm568, %v552, 0
        %649 = vmatprep.subr.mxu0 0.0
        %650 = vmatpush1.msra.mxu0 %v644
        %651 = vmatprep.subr.mxu0 0.0
        %652 = vmatpush1.msra.mxu0 %v645
        %653 = vmatprep.subr.mxu0 0.0
        %654 = vmatpush1.msra.mxu0 0.0
        %655 = vmatprep.subr.mxu0 0.0
        %656 = vmatpush1.msra.mxu0 0.0
        %657 = vmatprep.subr.mxu0 0.0
        %658 = vmatpush1.msra.mxu0 0.0
        %659 = vmatprep.subr.mxu0 0.0
        %660 = vmatpush1.msra.mxu0 0.0
        %661 = vmatprep.subr.mxu0 0.0
        %662 = vmatpush1.msra.mxu0 0.0
        %663 = vmatprep.subr.mxu0 0.0
        %664 = vmatpush1.msra.mxu0 0.0
        %665 = vmatprep.subr.mxu0 0.0
        %666 = vmatpush1.msra.mxu0 0.0
        %667 = vmatprep.subr.mxu0 0.0
        %668 = vmatpush1.msra.mxu0 0.0
        %669 = vmatprep.subr.mxu0 0.0
        %670 = vmatpush1.msra.mxu0 0.0
        %671 = vmatprep.subr.mxu0 0.0
        %672 = vmatpush1.msra.mxu0 0.0
        %673 = vmatprep.subr.mxu0 0.0
        %674 = vmatpush1.msra.mxu0 0.0
        %675 = vmatprep.subr.mxu0 0.0
        %676 = vmatpush1.msra.mxu0 0.0
        %677 = vmatprep.subr.mxu0 0.0
        %678 = vmatpush1.msra.mxu0 0.0
        %679 = vmatprep.subr.mxu0 0.0
        %680 = vmatpush1.msra.mxu0 0.0
        %681 = vmatprep.subr.mxu0 0.0
        %682 = vmatpush1.msra.mxu0 0.0
        %683 = vmatprep.subr.mxu0 0.0
        %684 = vmatpush1.msra.mxu0 0.0
        %685 = vmatprep.subr.mxu0 0.0
        %686 = vmatpush1.msra.mxu0 0.0
        %687 = vmatprep.subr.mxu0 0.0
        %688 = vmatpush1.msra.mxu0 0.0
        %689 = vmatprep.subr.mxu0 0.0
        %690 = vmatpush1.msra.mxu0 0.0
        %691 = vmatprep.subr.mxu0 0.0
        %692 = vmatpush1.msra.mxu0 0.0
        %693 = vmatprep.subr.mxu0 0.0
        %694 = vmatpush1.msra.mxu0 0.0
        %695 = vmatprep.subr.mxu0 0.0
        %696 = vmatpush1.msra.mxu0 0.0
        %697 = vmatprep.subr.mxu0 0.0
        %698 = vmatpush1.msra.mxu0 0.0
        %699 = vmatprep.subr.mxu0 0.0
        %700 = vmatpush1.msra.mxu0 0.0
        %701 = vmatprep.subr.mxu0 0.0
        %702 = vmatpush1.msra.mxu0 0.0
        %703 = vmatprep.subr.mxu0 0.0
        %704 = vmatpush1.msra.mxu0 0.0
        %705 = vmatprep.subr.mxu0 0.0
        %706 = vmatpush1.msra.mxu0 0.0
        %707 = vmatprep.subr.mxu0 0.0
        %708 = vmatpush1.msra.mxu0 0.0
        %709 = vmatprep.subr.mxu0 0.0
        %710 = vmatpush1.msra.mxu0 0.0
        %711 = vmatprep.subr.mxu0 0.0
        %712 = vmatpush1.msra.mxu0 0.0
        %713 = vmatprep.mubr.f32.mxu0 0.0
        %714 = vmatmul.mubr.f32.gmra.mrb[0].mxu0 %v647
        %v715 = vpop.f32.mrb[0].mxu0
        %v716 = vadd.f32 0.0, %v715
        %v717 = vpop.f32.mrb[0].mxu0
        %718 = vdwg.mxu0
        %v719 = vadd.f32 %v642, %v716
        %s720 = scalar_lea.vmem %s2, 32
        %v721 = vld [vmem:[%s720] sm:$0xff]
        %v722 = vld [vmem:[%s720 + $0x8] sm:$0xff]
        %v724 = vsel %vm568, %v557, 0
        %726 = vmatprep.subr.mxu0 0.0
        %727 = vmatpush1.msra.mxu0 %v721
        %728 = vmatprep.subr.mxu0 0.0
        %729 = vmatpush1.msra.mxu0 %v722
        %730 = vmatprep.subr.mxu0 0.0
        %731 = vmatpush1.msra.mxu0 0.0
        %732 = vmatprep.subr.mxu0 0.0
        %733 = vmatpush1.msra.mxu0 0.0
        %734 = vmatprep.subr.mxu0 0.0
        %735 = vmatpush1.msra.mxu0 0.0
        %736 = vmatprep.subr.mxu0 0.0
        %737 = vmatpush1.msra.mxu0 0.0
        %738 = vmatprep.subr.mxu0 0.0
        %739 = vmatpush1.msra.mxu0 0.0
        %740 = vmatprep.subr.mxu0 0.0
        %741 = vmatpush1.msra.mxu0 0.0
        %742 = vmatprep.subr.mxu0 0.0
        %743 = vmatpush1.msra.mxu0 0.0
        %744 = vmatprep.subr.mxu0 0.0
        %745 = vmatpush1.msra.mxu0 0.0
        %746 = vmatprep.subr.mxu0 0.0
        %747 = vmatpush1.msra.mxu0 0.0
        %748 = vmatprep.subr.mxu0 0.0
        %749 = vmatpush1.msra.mxu0 0.0
        %750 = vmatprep.subr.mxu0 0.0
        %751 = vmatpush1.msra.mxu0 0.0
        %752 = vmatprep.subr.mxu0 0.0
        %753 = vmatpush1.msra.mxu0 0.0
        %754 = vmatprep.subr.mxu0 0.0
        %755 = vmatpush1.msra.mxu0 0.0
        %756 = vmatprep.subr.mxu0 0.0
        %757 = vmatpush1.msra.mxu0 0.0
        %758 = vmatprep.subr.mxu0 0.0
        %759 = vmatpush1.msra.mxu0 0.0
        %760 = vmatprep.subr.mxu0 0.0
        %761 = vmatpush1.msra.mxu0 0.0
        %762 = vmatprep.subr.mxu0 0.0
        %763 = vmatpush1.msra.mxu0 0.0
        %764 = vmatprep.subr.mxu0 0.0
        %765 = vmatpush1.msra.mxu0 0.0
        %766 = vmatprep.subr.mxu0 0.0
        %767 = vmatpush1.msra.mxu0 0.0
        %768 = vmatprep.subr.mxu0 0.0
        %769 = vmatpush1.msra.mxu0 0.0
        %770 = vmatprep.subr.mxu0 0.0
        %771 = vmatpush1.msra.mxu0 0.0
        %772 = vmatprep.subr.mxu0 0.0
        %773 = vmatpush1.msra.mxu0 0.0
        %774 = vmatprep.subr.mxu0 0.0
        %775 = vmatpush1.msra.mxu0 0.0
        %776 = vmatprep.subr.mxu0 0.0
        %777 = vmatpush1.msra.mxu0 0.0
        %778 = vmatprep.subr.mxu0 0.0
        %779 = vmatpush1.msra.mxu0 0.0
        %780 = vmatprep.subr.mxu0 0.0
        %781 = vmatpush1.msra.mxu0 0.0
        %782 = vmatprep.subr.mxu0 0.0
        %783 = vmatpush1.msra.mxu0 0.0
        %784 = vmatprep.subr.mxu0 0.0
        %785 = vmatpush1.msra.mxu0 0.0
        %786 = vmatprep.subr.mxu0 0.0
        %787 = vmatpush1.msra.mxu0 0.0
        %788 = vmatprep.subr.mxu0 0.0
        %789 = vmatpush1.msra.mxu0 0.0
        %790 = vmatprep.mubr.f32.mxu0 0.0
        %791 = vmatmul.mubr.f32.gmra.mrb[0].mxu0 %v724
        %v792 = vpop.f32.mrb[0].mxu0
        %v793 = vadd.f32 0.0, %v792
        %v794 = vpop.f32.mrb[0].mxu0
        %795 = vdwg.mxu0
        %v796 = vadd.f32 %v719, %v793
        %s797 = sld [smem:[#allocation2]]
        %s798 = sadd.s32 %s797, %s30
        %p799 = scmp.lt.s32.totalorder %s798, 0
        %s800 = ssub.s32 0, %s798
        %s801 = scalar_select %p799, %s800, %s798
        %s802 = sdiv.u32.pop %s801, 3
        %s803 = srem.u32.pop %s801, 3
        %s804 = ssub.s32 0, %s803
        %s805 = scalar_select %p799, %s804, %s803
        %p806 = scmp.ne.s32.totalorder %s805, 0
        %p807 = scmp.lt.s32.totalorder %s805, 0
        %p808 = pnand %p807, %p806
        %p809 = pneg %p808
        %s810 = sadd.s32 %s805, 3
        %s811 = scalar_select %p809, %s810, %s805
        %s812 = scalar_lea.vmem %s11, 24
        %v813 = vld [vmem:[%s812] sm:$0xff]
        %v814 = vadd.f32 %v813, %v796
        %s815 = smul.u32 %s811, 8
        %s816 = scalar_lea.vmem %s11, %s815
        %v817 = vld [vmem:[%s816] sm:$0xff]
        %v818 = vsub.f32 %v814, %v817
        %819 = vst.msk [vmem:[%s812] sm:$0xff] %vm568, %v818
        %820 = vst.msk [vmem:[%s816] sm:$0xff] %vm568, %v796
        %v821 = vsel %vm568, %v818, 0.0
        %822 = vadd.xlane.f32.xlu0 %v821
        %v823 = vpop.xlane.xlu0 %822
        %v824 = vrot.slane %v823, 4
        %v825 = vadd.f32 %v823, %v824
        %v826 = vrot.slane %v825, 2
        %v827 = vadd.f32 %v825, %v826
        %v828 = vrot.slane %v827, 1
        %v829 = vadd.f32 %v827, %v828
        %s830 = vtos %v829
        %s831 = smul.f32 %s830, 0.0078125
        %v832 = vmul.f32 %v818, %v818
        %v833 = vsel %vm568, %v832, 0.0
        %834 = vadd.xlane.f32.xlu0 %v833
        %v835 = vpop.xlane.xlu0 %834
        %v836 = vrot.slane %v835, 4
        %v837 = vadd.f32 %v835, %v836
        %v838 = vrot.slane %v837, 2
        %v839 = vadd.f32 %v837, %v838
        %v840 = vrot.slane %v839, 1
        %v841 = vadd.f32 %v839, %v840
        %s842 = vtos %v841
        %s843 = smul.f32 %s842, 0.0078125
        %s844 = smul.f32 %s831, %s831
        %s845 = ssub.f32 %s843, %s844
        %v846 = vstv %s831
        %v847 = vsub.f32 %v818, %v846
        %s848 = sadd.f32 %s845, 1e-05
        %v849 = vstv %s848
        %v850 = vrsqrt.pop %v849
        %s851 = vtos %v850
        %v852 = vstv %s851
        %v853 = vmul.f32 %v847, %v852
        %v854 = vld [vmem:[#allocation6] sm:$0xff]
        %v855 = vmul.f32 %v853, %v854
        %v856 = vld [vmem:[#allocation7] sm:$0xff]
        %v857 = vadd.f32 %v855, %v856
        %v858 = vmax.f32 %v857, 0.0
        %v859 = vsel %vm568, %v562, 0.0
        %860 = vadd.xlane.f32.xlu0 %v859
        %v861 = vpop.xlane.xlu0 %860
        %v862 = vrot.slane %v861, 4
        %v863 = vadd.f32 %v861, %v862
        %v864 = vrot.slane %v863, 2
        %v865 = vadd.f32 %v863, %v864
        %v866 = vrot.slane %v865, 1
        %v867 = vadd.f32 %v865, %v866
        %s868 = vtos %v867
        %s869 = smul.f32 %s868, 0.0078125
        %v870 = vmul.f32 %v562, %v562
        %v871 = vsel %vm568, %v870, 0.0
        %872 = vadd.xlane.f32.xlu0 %v871
        %v873 = vpop.xlane.xlu0 %872
        %v874 = vrot.slane %v873, 4
        %v875 = vadd.f32 %v873, %v874
        %v876 = vrot.slane %v875, 2
        %v877 = vadd.f32 %v875, %v876
        %v878 = vrot.slane %v877, 1
        %v879 = vadd.f32 %v877, %v878
        %s880 = vtos %v879
        %s881 = smul.f32 %s880, 0.0078125
        %s882 = smul.f32 %s869, %s869
        %s883 = ssub.f32 %s881, %s882
        %v884 = vstv %s869
        %v885 = vsub.f32 %v562, %v884
        %s886 = sadd.f32 %s883, 1e-05
        %v887 = vstv %s886
        %v888 = vrsqrt.pop %v887
        %s889 = vtos %v888
        %v890 = vstv %s889
        %v891 = vmul.f32 %v885, %v890
        %v892 = vld [vmem:[#allocation9] sm:$0xff]
        %v893 = vmul.f32 %v891, %v892
        %v894 = vld [vmem:[#allocation10] sm:$0xff]
        %v895 = vadd.f32 %v893, %v894
        %v896 = vadd.f32 %v858, %v895
        %v897 = vmax.f32 %v896, 0.0
        %898 = vst.msk [vmem:[%s438] sm:$0xff] %vm568, %v897
        %s899 = sand.u32 %s253, 1
        %s900 = scalar_lea.sflag [#allocation4], %s899
        %s901 = sand.u32 %s253, 1
        %s902 = smul.addr %s901, 8
        %s903 = scalar_lea.vmem [#allocation12], %s902
        // Predicated region
        $region85: #{forward.1} parent=59 // pred_check
          %p904 = pneg %p263
        $region86: #{forward.1} parent=59 // pred_check_branch
          %906 = sbr.rel (%p904) target = $region88
        $region87: #{forward.1} parent=59 // pred_region
          %s908 = ssub.s32 128, 128
          %909 = vsyncadd %s900, %s908
          %s910 = smul.addr %s30, 128
          %s911 = scalar_lea.hbm %s10, %s910
          %s913 = sshll.u32 %s903, 4
          %s914 = int_to_ptr.vmem [resolvable:$true] %s913
          %916 = dma.vmem_to_hbm [thread:$0]  %s914, 128, %s911, %s900
        $region88: #{forward.1} parent=59 // pred_fallthru
          _
        // Predicated region
        $region89: #{forward.1} parent=59 // pred_check
          %p917 = pneg %p284
        $region90: #{forward.1} parent=59 // pred_check_branch
          %919 = sbr.rel (%p917) target = $region92
        $region91: #{forward.1} parent=59 // pred_region
          _
        $region92: #{forward.1} parent=59 // pred_fallthru
          _
        // Predicated region
        $region93: #{forward.1} parent=59 // pred_check
          %p920 = pneg %p284
        $region94: #{forward.1} parent=59 // pred_check_branch
          %922 = sbr.rel (%p920) target = $region96
        $region95: #{forward.1} parent=59 // pred_region
          _
        $region96: #{forward.1} parent=59 // pred_fallthru
          _
      $region60: #{forward.1} parent=5 // pred_fallthru
        _
      %p923 = scmp.le.s32.totalorder 2, %s25
      // Predicated region
      $region97: #{forward.1} parent=5 // pred_check
        %p924 = pneg %p923
      $region98: #{forward.1} parent=5 // pred_check_branch
        %926 = sbr.rel (%p924) target = $region100
      $region99: #{forward.1} parent=5 // pred_region
        %s927 = ssub.s32 %s25, 2
        // Predicated region
        $region101: #{forward.1} parent=99 // pred_check
          %p928 = pneg %p269
        $region102: #{forward.1} parent=99 // pred_check_branch
          %930 = sbr.rel (%p928) target = $region104
        $region103: #{forward.1} parent=99 // pred_region
          %s931 = sand.u32 %s254, 1
          %s932 = scalar_lea.sflag [#allocation4], %s931
          %s933 = sand.u32 %s254, 1
          %s934 = smul.addr %s933, 8
          %s935 = scalar_lea.vmem [#allocation12], %s934
          %936 = dma.done %s932, 128
        $region104: #{forward.1} parent=99 // pred_fallthru
          _
      $region100: #{forward.1} parent=5 // pred_fallthru
        _
    $region6: #{forward.1} parent=1 // loop_footer
      %s29 = sadd.s32 1, %s25
    $region7: #{forward.1} parent=1 // loop_footer_branch
      %24 = sbr.rel target = $region3
    $region8: #{forward.1} parent=1 // loop_exit
      _
    %937 = vsyncpa [#allocation3], 1
    %s938 = scalar_lea.sflag [#allocation3], 1
    %939 = vsyncpa %s938, 1
    %940 = vsyncpa [#allocation8], 1
    %941 = vsyncpa [#allocation11], 1
    %942 = vsyncpa [#allocation4], 1
    %s943 = scalar_lea.sflag [#allocation4], 1
    %944 = vsyncpa %s943, 1
    %945 = vsyncpa [#allocation5], 1
    %s946 = scalar_lea.sflag [#allocation5], 1
    %947 = vsyncpa %s946, 1

</llo_original>
